<compile_context>
chip_gen: v5e
topology: v5e:2x2
jax: 0.10.0
libtpu: 0.0.40
codegen_flags: <defaults>
</compile_context>

<pallas_src>
import functools

import jax
import jax.numpy as jnp
from jax.experimental import pallas as pl
from jax.experimental.pallas import tpu as pltpu

LANES = 128


def _smape_kernel(pred_ref, true_ref, out_ref, acc_ref, *,
                  total_rows, block_rows, blocks_per_shard, use_mask):
    # pred_ref / true_ref: (block_rows, 128) tiles in VMEM (native dtype)
    # out_ref:             (1, 1) f32 partial sum for this shard (SMEM)
    # acc_ref:             (8, 128) f32 running vector accumulator (VMEM)
    j = pl.program_id(1)   # reduction axis ("arbitrary")

    @pl.when(j == 0)
    def _():
        acc_ref[...] = jnp.zeros_like(acc_ref)

    y_pred = pred_ref[...].astype(jnp.float32)
    y_true = true_ref[...].astype(jnp.float32)

    denom = (jnp.abs(y_true) + jnp.abs(y_pred)) * 0.5 + 1e-8
    # denom > 0 so abs((t-p)/denom) == abs(t-p) * (1/denom).
    ape = jnp.abs(y_true - y_pred) * pl.reciprocal(denom, approx=False)

    if use_mask:
        # Mask rows that fall outside the real data: the tail of a partial
        # last block and any fully out-of-range (clamped) blocks from the
        # shard split.  Statically skipped when the grid divides evenly.
        s = pl.program_id(0)
        global_block = s * blocks_per_shard + j
        start_row = global_block * block_rows
        row_ids = start_row + jax.lax.broadcasted_iota(
            jnp.int32, (block_rows, LANES), 0)
        ape = jnp.where(row_ids < total_rows, ape, 0.0)

    # Vector accumulator: sum (block_rows,128) down to one (8,128) vreg per
    # step with pure VPU adds; no per-step scalar XLU reduction.
    acc_ref[...] += jnp.sum(ape.reshape(block_rows // 8, 8, LANES), axis=0)

    @pl.when(j == pl.num_programs(1) - 1)
    def _():
        out_ref[0, 0] = jnp.sum(acc_ref[...])


def _native_or_f32(x):
    # Keep f32/bf16 in their native dtype (upcast happens inside the kernel);
    # anything else goes through f32.
    if x.dtype in (jnp.dtype(jnp.float32), jnp.dtype(jnp.bfloat16)):
        return x
    return x.astype(jnp.float32)


def smape(y_pred, y_true, *, block_rows=2048):
    assert y_pred.shape == y_true.shape, "shapes must match (no broadcasting)"
    n_elements = y_pred.size

    yp = jnp.ravel(_native_or_f32(y_pred))
    yt = jnp.ravel(_native_or_f32(y_true))

    # Sublane multiple per dtype: 8 for 4-byte, 16 for 2-byte.
    mult = max(32 // jnp.dtype(yp.dtype).itemsize,
               32 // jnp.dtype(yt.dtype).itemsize)

    # Pad only to a multiple of (mult * 128) elements (tiny; zero elements
    # contribute exactly 0 to the SMAPE sum).  No padding to block boundaries.
    tile_elems = mult * LANES
    pad = (-n_elements) % tile_elems
    if pad:
        # TODO(synk): a fully copy-free tail (manual 1-D DMA) would avoid this
        # pad-copy for sizes not divisible by mult*128; cost is <= 2047 zeros.
        yp = jnp.pad(yp, (0, pad))
        yt = jnp.pad(yt, (0, pad))
    rows = (n_elements + pad) // LANES  # multiple of `mult`

    # Clamp block size to the data; keep it a multiple of the sublane tile.
    block_rows = max(mult, min(block_rows, rows))

    yp2 = yp.reshape(rows, LANES)
    yt2 = yt.reshape(rows, LANES)

    num_blocks = pl.cdiv(rows, block_rows)
    num_shards = 2 if num_blocks >= 2 else 1   # 2 TCs on v7x; harmless elsewhere
    blocks_per_shard = pl.cdiv(num_blocks, num_shards)

    # Masking only needed if the last block is partial or the shard split
    # introduces duplicated (clamped) blocks.  Statically known.
    even_blocks = (rows % block_rows) == 0
    even_shards = (num_blocks % num_shards) == 0
    use_mask = not (even_blocks and even_shards)

    if use_mask:
        def in_map(s, j):
            # Clamp so the shard split never indexes past the last real block;
            # the kernel-side row mask zeroes the duplicated block's sum.
            return (jnp.minimum(s * blocks_per_shard + j, num_blocks - 1), 0)
    else:
        def in_map(s, j):
            return (s * blocks_per_shard + j, 0)

    in_spec = pl.BlockSpec((block_rows, LANES), in_map)

    partial_sums = pl.pallas_call(
        functools.partial(
            _smape_kernel,
            total_rows=rows,
            block_rows=block_rows,
            blocks_per_shard=blocks_per_shard,
            use_mask=use_mask,
        ),
        out_shape=jax.ShapeDtypeStruct((num_shards, 1), jnp.float32),
        grid_spec=pltpu.PrefetchScalarGridSpec(
            num_scalar_prefetch=0,
            grid=(num_shards, blocks_per_shard),
            in_specs=[in_spec, in_spec],
            out_specs=pl.BlockSpec(
                (1, 1), lambda s, j: (s, 0), memory_space=pltpu.SMEM
            ),
            scratch_shapes=[pltpu.VMEM((8, LANES), jnp.float32)],
        ),
        compiler_params=pltpu.CompilerParams(
            dimension_semantics=("parallel", "arbitrary"),
            vmem_limit_bytes=32 * 1024 * 1024,
        ),
    )(yp2, yt2)

    return jnp.sum(partial_sums) / jnp.float32(n_elements)


def smape_ref(y_pred, y_true):
    y_pred = y_pred.astype(jnp.float32)
    y_true = y_true.astype(jnp.float32)
    ape = jnp.abs(
        (y_true - y_pred) / ((jnp.abs(y_true) + jnp.abs(y_pred)) / 2 + 1e-8)
    )
    return jnp.mean(ape)


if __name__ == "__main__":
    key = jax.random.PRNGKey(0)
    k1, k2, k3, k4 = jax.random.split(key, 4)

    # Primary example input (NCHW-style, matches the module's intended use).
    shape = (2, 4, 16, 16)
    y_pred = jax.random.normal(k1, shape, dtype=jnp.float32)
    y_true = jax.random.normal(k2, shape, dtype=jnp.float32)

    result = smape(y_pred, y_true)
    jax.block_until_ready(result)
    expected = smape_ref(y_pred, y_true)
    assert jnp.allclose(result, expected, rtol=1e-5, atol=1e-6), (
        f"mismatch: {result} vs {expected}"
    )

    # Secondary check with an odd size to exercise the pad / masked-tail path.
    shape2 = (3, 5, 7, 11)
    y_pred2 = jax.random.normal(k3, shape2, dtype=jnp.float32)
    y_true2 = jax.random.normal(k4, shape2, dtype=jnp.float32)
    result2 = smape(y_pred2, y_true2)
    jax.block_until_ready(result2)
    expected2 = smape_ref(y_pred2, y_true2)
    assert jnp.allclose(result2, expected2, rtol=1e-5, atol=1e-6), (
        f"mismatch (odd shape): {result2} vs {expected2}"
    )

    print("KERNEL_OK")
</pallas_src>

<mosaic_0001>
module attributes {stable_mosaic.version = 11 : i64} {
  func.func @_smape_kernel(%arg0: i32, %arg1: i32, %arg2: memref<16x128xf32, #tpu.memory_space<vmem>>, %arg3: memref<16x128xf32, #tpu.memory_space<vmem>>, %arg4: memref<1x1xf32, #tpu.memory_space<smem>>, %arg5: memref<8x128xf32, #tpu.memory_space<vmem>>) attributes {dimension_semantics = [#tpu.dimension_semantics<parallel>, #tpu.dimension_semantics<arbitrary>], iteration_bounds = array<i64: 1, 1>, scalar_prefetch = 0 : i64, scratch_operands = 1 : i64, tpu.core_type = #tpu.core_type<tc>, window_params = [{transform_indices = @transform_0, window_bounds = array<i64: 16, 128>}, {transform_indices = @transform_1, window_bounds = array<i64: 16, 128>}, {transform_indices = @transform_2, window_bounds = array<i64: 1, 1>}]} {
    %c0_i32 = arith.constant 0 : i32
    %0 = arith.cmpi eq, %arg1, %c0_i32 : i32
    %1 = arith.extui %0 : i1 to i32
    %c0_i32_0 = arith.constant 0 : i32
    %2 = arith.cmpi ne, %1, %c0_i32_0 : i32
    scf.if %2 {
      %cst_12 = arith.constant 0.000000e+00 : f32
      %24 = vector.broadcast %cst_12 : f32 to vector<8x128xf32>
      %c0_13 = arith.constant 0 : index
      %c0_14 = arith.constant 0 : index
      %25 = vector.load %arg5[%c0_13, %c0_14] : memref<8x128xf32, #tpu.memory_space<vmem>>, vector<8x128xf32>
      tpu.vector_store %arg5[%c0_13, %c0_14], %24 {strides = array<i32>} : memref<8x128xf32, #tpu.memory_space<vmem>>, vector<8x128xf32>,
    } else {
    }
    %c0 = arith.constant 0 : index
    %c0_1 = arith.constant 0 : index
    %3 = vector.load %arg2[%c0, %c0_1] : memref<16x128xf32, #tpu.memory_space<vmem>>, vector<16x128xf32>
    %c0_2 = arith.constant 0 : index
    %c0_3 = arith.constant 0 : index
    %4 = vector.load %arg3[%c0_2, %c0_3] : memref<16x128xf32, #tpu.memory_space<vmem>>, vector<16x128xf32>
    %5 = math.absf %4 : vector<16x128xf32>
    %6 = math.absf %3 : vector<16x128xf32>
    %7 = arith.addf %5, %6 : vector<16x128xf32>
    %cst = arith.constant 5.000000e-01 : f32
    %8 = vector.broadcast %cst : f32 to vector<16x128xf32>
    %9 = arith.mulf %7, %8 : vector<16x128xf32>
    %cst_4 = arith.constant 9.99999993E-9 : f32
    %10 = vector.broadcast %cst_4 : f32 to vector<16x128xf32>
    %11 = arith.addf %9, %10 : vector<16x128xf32>
    %12 = arith.subf %4, %3 : vector<16x128xf32>
    %13 = math.absf %12 : vector<16x128xf32>
    %14 = tpu.reciprocal %11 : vector<16x128xf32> -> vector<16x128xf32>
    %15 = arith.mulf %13, %14 : vector<16x128xf32>
    %c0_5 = arith.constant 0 : index
    %c0_6 = arith.constant 0 : index
    %16 = vector.load %arg5[%c0_5, %c0_6] : memref<8x128xf32, #tpu.memory_space<vmem>>, vector<8x128xf32>
    %17 = vector.shape_cast %15 : vector<16x128xf32> to vector<2x8x128xf32>
    %cst_7 = arith.constant dense<0.000000e+00> : vector<8x128xf32>
    %18 = vector.multi_reduction <add>, %17, %cst_7 [0] : vector<2x8x128xf32> to vector<8x128xf32>
    %19 = arith.addf %16, %18 : vector<8x128xf32>
    %c0_8 = arith.constant 0 : index
    %c0_9 = arith.constant 0 : index
    %20 = vector.load %arg5[%c0_8, %c0_9] : memref<8x128xf32, #tpu.memory_space<vmem>>, vector<8x128xf32>
    tpu.vector_store %arg5[%c0_8, %c0_9], %19 {strides = array<i32>} : memref<8x128xf32, #tpu.memory_space<vmem>>, vector<8x128xf32>,
    %c0_i32_10 = arith.constant 0 : i32
    %21 = arith.cmpi eq, %arg1, %c0_i32_10 : i32
    %22 = arith.extui %21 : i1 to i32
    %c0_i32_11 = arith.constant 0 : i32
    %23 = arith.cmpi ne, %22, %c0_i32_11 : i32
    scf.if %23 {
      %c0_12 = arith.constant 0 : index
      %c0_13 = arith.constant 0 : index
      %24 = vector.load %arg5[%c0_12, %c0_13] : memref<8x128xf32, #tpu.memory_space<vmem>>, vector<8x128xf32>
      %25 = vector.shape_cast %24 : vector<8x128xf32> to vector<1x8x128xf32>
      %cst_14 = arith.constant dense<0.000000e+00> : vector<1xf32>
      %26 = vector.multi_reduction <add>, %25, %cst_14 [1, 2] : vector<1x8x128xf32> to vector<1xf32>
      %27 = vector.shape_cast %26 : vector<1xf32> to vector<1x1x1xf32>
      %28 = vector.extract %27[0, 0, 0] : f32 from vector<1x1x1xf32>
      %c0_15 = arith.constant 0 : index
      %c0_16 = arith.constant 0 : index
      %29 = memref.load %arg4[%c0_15, %c0_16] : memref<1x1xf32, #tpu.memory_space<smem>>
      memref.store %28, %arg4[%c0_15, %c0_16] : memref<1x1xf32, #tpu.memory_space<smem>>
    } else {
    }
    return
  }
  func.func @transform_0(%arg0: i32, %arg1: i32) -> (i32, i32) {
    %c1_i32 = arith.constant 1 : i32
    %0 = arith.muli %arg0, %c1_i32 : i32
    %1 = arith.addi %0, %arg1 : i32
    %c0_i32 = arith.constant 0 : i32
    %c0_i32_0 = arith.constant 0 : i32
    return %1, %c0_i32 : i32, i32
  }
  func.func @transform_1(%arg0: i32, %arg1: i32) -> (i32, i32) {
    %c1_i32 = arith.constant 1 : i32
    %0 = arith.muli %arg0, %c1_i32 : i32
    %1 = arith.addi %0, %arg1 : i32
    %c0_i32 = arith.constant 0 : i32
    %c0_i32_0 = arith.constant 0 : i32
    return %1, %c0_i32 : i32, i32
  }
  func.func @transform_2(%arg0: i32, %arg1: i32) -> (i32, i32) {
    %c0_i32 = arith.constant 0 : i32
    %c0_i32_0 = arith.constant 0 : i32
    return %arg0, %c0_i32 : i32, i32
  }
}

</mosaic_0001>

<llo_original>
// kernel: tpu_custom_call.1
$region0: #{tpu_custom_call.1}
  #allocation0 [shape = 'u32[]', space=smem, size = 0x4, offset = 0x4, fixed_abs, tag = 'smem constant byte address 0x4 - core index']
  #allocation1 [shape = 'u32[72,128]{1,0:T(1,128)}', space=vmem, size = 0x9000, scoped, tag = 'internal scratch']
  #allocation2 [shape = 'f32[8,128]{1,0:T(8,128)}', space=vmem, size = 0x1000, scoped, tag = 'scratch operand']
  %s0 = inlined_call_operand.hbm [shape: f32[16,128], index: 0, kind: input, shape index: {}]
  %s1 = inlined_call_operand.hbm [shape: f32[16,128], index: 1, kind: input, shape index: {}]
  %s2 = inlined_call_operand.hbm [shape: f32[1,1], index: 2, kind: output, shape index: {}]
  %s3 = sld [smem:[#allocation0]]
  $region34: #{tpu_custom_call.1} parent=0
    _
  %s5 = ssub.s32 1, %s3
  %s6 = scalar_select 0, %s5, %s3
  $region1: #{tpu_custom_call.1} parent=0
    #allocation3 [shape = 'u8[8192]{0}', space=vmem, size = 0x2000, scoped, tag = 'input window, operand 0, single buffered']
    #allocation4 [shape = 's32[1]{0}', space=sflag, size = 0x4, scoped, tag = 'scoped memory for tpu_custom_call.1']
    #allocation5 [shape = 's32[1]{0}', space=sflag, size = 0x4, scoped, tag = 'scoped memory for tpu_custom_call.1']
    #allocation6 [shape = 'u8[8192]{0}', space=vmem, size = 0x2000, scoped, tag = 'input window, operand 1, single buffered']
    #allocation7 [shape = 's32[1]{0}', space=sflag, size = 0x4, scoped, tag = 'scoped memory for tpu_custom_call.1']
    #allocation8 [shape = 'u8[512]{0}', space=smem, size = 0x200, scoped, tag = 'output window, operand 0, single buffered']
    %7 = vsyncpa [#allocation4], 0
    %8 = vsyncpa [#allocation7], 0
    %9 = vsyncpa [#allocation5], 0
    // Predicated region
    $region2: #{tpu_custom_call.1} parent=1 // pred_check
      _
    $region3: #{tpu_custom_call.1} parent=1 // pred_check_branch
      %11 = sbr.rel (0) target = $region5
    $region4: #{tpu_custom_call.1} parent=1 // pred_region
      %s12 = sadd.s32 0, 0
      %s13 = smul.u32 2, %s12
      %15 = vsyncadd [#allocation4], 0
      %s16 = smul.addr %s13, 8
      %s17 = scalar_lea.hbm %s0, %s16
      %s18 = sshll.u32 %s17, 4
      %s19 = int_to_ptr.hbm [resolvable:$true] %s18
      %s20 = sshll.u32 [#allocation3], 4
      %s21 = int_to_ptr.vmem [resolvable:$true] %s20
      %26 = dma.hbm_to_vmem [thread:$0]  %s19, 256, %s21, [#allocation4], 128, 128, 8
    $region5: #{tpu_custom_call.1} parent=1 // pred_fallthru
      _
    // Predicated region
    $region6: #{tpu_custom_call.1} parent=1 // pred_check
      _
    $region7: #{tpu_custom_call.1} parent=1 // pred_check_branch
      %28 = sbr.rel (0) target = $region9
    $region8: #{tpu_custom_call.1} parent=1 // pred_region
      %s29 = sadd.s32 0, 0
      %s30 = smul.u32 2, %s29
      %32 = vsyncadd [#allocation7], 0
      %s33 = smul.addr %s30, 8
      %s34 = scalar_lea.hbm %s1, %s33
      %s35 = sshll.u32 %s34, 4
      %s36 = int_to_ptr.hbm [resolvable:$true] %s35
      %s37 = sshll.u32 [#allocation6], 4
      %s38 = int_to_ptr.vmem [resolvable:$true] %s37
      %43 = dma.hbm_to_vmem [thread:$0]  %s36, 256, %s38, [#allocation7], 128, 128, 8
    $region9: #{tpu_custom_call.1} parent=1 // pred_fallthru
      _
    // Predicated region
    $region10: #{tpu_custom_call.1} parent=1 // pred_check
      _
    $region11: #{tpu_custom_call.1} parent=1 // pred_check_branch
      %45 = sbr.rel (0) target = $region13
    $region12: #{tpu_custom_call.1} parent=1 // pred_region
      %47 = dma.done [#allocation4], 256
    $region13: #{tpu_custom_call.1} parent=1 // pred_fallthru
      _
    // Predicated region
    $region14: #{tpu_custom_call.1} parent=1 // pred_check
      _
    $region15: #{tpu_custom_call.1} parent=1 // pred_check_branch
      %49 = sbr.rel (0) target = $region17
    $region16: #{tpu_custom_call.1} parent=1 // pred_region
      %51 = dma.done [#allocation7], 256
    $region17: #{tpu_custom_call.1} parent=1 // pred_fallthru
      _
    %s52 = sadd.s32 0, 0
    %s53 = smul.u32 2, %s52
    %s54 = sadd.s32 0, 0
    %s55 = smul.u32 2, %s54
    %p56 = scmp.eq.s32.totalorder 0, 0
    // Predicated region
    $region18: #{tpu_custom_call.1} parent=1 // pred_check
      %p57 = pneg %p56
    $region19: #{tpu_custom_call.1} parent=1 // pred_check_branch
      %59 = sbr.rel (%p57) target = $region21
    $region20: #{tpu_custom_call.1} parent=1 // pred_region
      %60 = vst [vmem:[#allocation2] sm:$0xff] 0.0
    $region21: #{tpu_custom_call.1} parent=1 // pred_fallthru
      _
    %v61 = vld [vmem:[#allocation3] sm:$0xff]
    %v62 = vld [vmem:[#allocation3 + $0x8] sm:$0xff]
    %v63 = vld [vmem:[#allocation6] sm:$0xff]
    %v64 = vld [vmem:[#allocation6 + $0x8] sm:$0xff]
    %v65 = vand.u32 2147483647, %v63
    %v66 = vand.u32 2147483647, %v64
    %v67 = vand.u32 2147483647, %v61
    %v68 = vand.u32 2147483647, %v62
    %v69 = vadd.f32 %v65, %v67
    %v70 = vadd.f32 %v66, %v68
    %v71 = vmul.f32 %v69, 0.5
    %v72 = vmul.f32 %v70, 0.5
    %v73 = vadd.f32 %v71, 1e-08
    %v74 = vadd.f32 %v72, 1e-08
    %v75 = vsub.f32 %v63, %v61
    %v76 = vsub.f32 %v64, %v62
    %v77 = vand.u32 2147483647, %v75
    %v78 = vand.u32 2147483647, %v76
    %v79 = vrcp.pop %v73
    %v80 = vmul.f32 %v73, %v79
    %v81 = vsub.f32 1.0, %v80
    %v82 = vmul.f32 %v79, %v81
    %v83 = vadd.f32 %v79, %v82
    %vm84 = vweird.f32 %v73
    %vm85 = vweird.f32 %v79
    %vm86 = vmor %vm84, %vm85
    %v87 = vsel %vm86, %v79, %v83
    %v88 = vand.u32 2147483647, %v73
    %vm89 = vcmp.eq.f32.partialorder %v88, 8.507059e+37
    %v90 = vand.u32 %v73, 2147483648
    %v91 = vor.u32 1.1754944e-38, %v90
    %v92 = vsel %vm89, %v91, %v87
    %v93 = vrcp.pop %v74
    %v94 = vmul.f32 %v74, %v93
    %v95 = vsub.f32 1.0, %v94
    %v96 = vmul.f32 %v93, %v95
    %v97 = vadd.f32 %v93, %v96
    %vm98 = vweird.f32 %v74
    %vm99 = vweird.f32 %v93
    %vm100 = vmor %vm98, %vm99
    %v101 = vsel %vm100, %v93, %v97
    %v102 = vand.u32 2147483647, %v74
    %vm103 = vcmp.eq.f32.partialorder %v102, 8.507059e+37
    %v104 = vand.u32 %v74, 2147483648
    %v105 = vor.u32 1.1754944e-38, %v104
    %v106 = vsel %vm103, %v105, %v101
    %v107 = vmul.f32 %v77, %v92
    %v108 = vmul.f32 %v78, %v106
    %v109 = vld [vmem:[#allocation2] sm:$0xff]
    %v110 = vadd.f32 %v107, %v108
    %v111 = vadd.f32 %v109, %v110
    %112 = vst [vmem:[#allocation2] sm:$0xff] %v111
    // Predicated region
    $region22: #{tpu_custom_call.1} parent=1 // pred_check
      %p113 = pneg %p56
    $region23: #{tpu_custom_call.1} parent=1 // pred_check_branch
      %115 = sbr.rel (%p113) target = $region25
    $region24: #{tpu_custom_call.1} parent=1 // pred_region
      %v116 = vld [vmem:[#allocation2] sm:$0xff]
      %117 = vadd.xlane.f32.xlu0 %v116
      %v118 = vpop.xlane.xlu0 %117
      %v119 = vrot.slane %v118, 4
      %v120 = vadd.f32 %v118, %v119
      %v121 = vrot.slane %v120, 2
      %v122 = vadd.f32 %v120, %v121
      %v123 = vrot.slane %v122, 1
      %v124 = vadd.f32 %v122, %v123
      %s125 = vtos %v124
      %s126 = scalar_lea.smem [#allocation8], 0
      %127 = sst [smem:[%s126]] %s125
    $region25: #{tpu_custom_call.1} parent=1 // pred_fallthru
      _
    // Predicated region
    $region26: #{tpu_custom_call.1} parent=1 // pred_check
      _
    $region27: #{tpu_custom_call.1} parent=1 // pred_check_branch
      %129 = sbr.rel (0) target = $region29
    $region28: #{tpu_custom_call.1} parent=1 // pred_region
      %131 = vsyncadd [#allocation5], 0
      %s133 = sshll.u32 %s2, 4
      %s134 = int_to_ptr.hbm [resolvable:$true] %s133
      %136 = dma.smem_to_hbm [#allocation8], 16, %s134, [#allocation5]
    $region29: #{tpu_custom_call.1} parent=1 // pred_fallthru
      _
    // Predicated region
    $region30: #{tpu_custom_call.1} parent=1 // pred_check
      _
    $region31: #{tpu_custom_call.1} parent=1 // pred_check_branch
      %138 = sbr.rel (0) target = $region33
    $region32: #{tpu_custom_call.1} parent=1 // pred_region
      %140 = dma.done [#allocation5], 16
    $region33: #{tpu_custom_call.1} parent=1 // pred_fallthru
      _
    %141 = sfence
    %142 = vsyncpa [#allocation4], 1
    %143 = vsyncpa [#allocation7], 1
    %144 = vsyncpa [#allocation5], 1

</llo_original>
